<compile_context>
chip_gen: v7x
topology: tpu7x:2x2x1
jax: 0.10.0
libtpu: 0.0.40
codegen_flags: <defaults>
</compile_context>

<pallas_src>
import jax
import jax.numpy as jnp
import numpy as np
from jax.experimental import pallas as pl
from jax.experimental.pallas import tpu as pltpu


def _scores_kernel(hidden_ref, enc_ref, mask_ref,
                   whT_ref, weT_ref, bT_ref, vT_ref,
                   out_ref):
    """Masked (un-normalized) attention scores for one L-tile, all batch rows.

    hidden_ref : [B, H2]       decoder hidden (replicated across grid steps)
    enc_ref    : [tL, B, E2]   encoder-output tile (original [L, B, E2] layout)
    mask_ref   : [B, tL]       0.0 == masked position (includes L padding)
    whT_ref    : [D, H2]       attn weight, hidden slice (raw nn.Linear layout)
    weT_ref    : [D, E2]       attn weight, encoder slice (raw nn.Linear layout)
    bT_ref     : [D, 1]        attn bias as a column
    vT_ref     : [D, 1]        v weight as a column
    out_ref    : [B, tL]       masked scores (lane-dense in L)
    """
    whT = whT_ref[...]
    weT = weT_ref[...]
    hidden = hidden_ref[...]

    # Hidden projection with the bias folded in, transposed layout:
    #   hbT[d, b] = sum_k w_attn[d, k] * hidden[b, k] + b_attn[d]
    hbT = jax.lax.dot_general(
        whT, hidden, (((1,), (1,)), ((), ())),
        preferred_element_type=jnp.float32) + bT_ref[...]          # [D, B] f32

    vT = vT_ref[...]                                               # [D, 1] f32
    mask = mask_ref[...]                                           # [B, tL]

    B = hidden.shape[0]
    rows = []
    for b in range(B):                          # B is a compile-time constant
        enc_b = enc_ref[:, b, :]                # [tL, E2]
        # projT[d, l] = sum_e w_attn_enc[d, e] * enc[l, b, e]
        # -> one [D, E2] x [E2, tL] MXU matmul, lane-dense result [D, tL].
        projT = jax.lax.dot_general(
            weT, enc_b, (((1,), (1,)), ((), ())),
            preferred_element_type=jnp.float32)                    # [D, tL] f32
        energyT = jnp.tanh(projT + hbT[:, b:b + 1])                # lane-dense EUP
        # v-projection as VPU multiply + sublane reduce (no width-1 MXU matmul).
        rows.append(jnp.sum(energyT * vT, axis=0, keepdims=True))  # [1, tL]

    scores = jnp.concatenate(rows, axis=0)                         # [B, tL]
    scores = jnp.where(mask == 0.0, jnp.float32(-1e10), scores)
    out_ref[...] = scores                                          # one full store


def _softmax_kernel(scores_ref, out_ref):
    """Row softmax over the (tiny) [B, L_pad] masked score matrix."""
    s = scores_ref[...]
    m = jnp.max(s, axis=1, keepdims=True)
    e = jnp.exp(s - m)
    # Exact division on purpose: approx reciprocal (~2^-12 rel err) would not
    # meet the 1e-5 correctness tolerance.
    out_ref[...] = e / jnp.sum(e, axis=1, keepdims=True)


def prepare_attention_params(w_attn, b_attn, w_v, compute_dtype=jnp.float32):
    """One-time (hoisted) parameter plumbing for the kernel.

    w_attn : [D, H2 + E2]  nn.Linear(attn) weight (concat order: hidden, enc)
    b_attn : [D]           nn.Linear(attn) bias
    w_v    : [1, D]        nn.Linear(v) weight (no bias)
    """
    D = w_attn.shape[0]
    H2 = 2 * D
    whT = w_attn[:, :H2].astype(compute_dtype)      # [D, H2]
    weT = w_attn[:, H2:].astype(compute_dtype)      # [D, E2]
    bT = b_attn.reshape(D, 1).astype(jnp.float32)   # [D, 1]
    vT = w_v.reshape(D, 1).astype(jnp.float32)      # [D, 1]
    return whT, weT, bT, vT


def _choose_tile_l(L, B, E2, itemsize):
    """Pick the L tile so that the enc block stays comfortably inside VMEM
    (double-buffered) on all of v5e / v6e / v7x (64 MiB physical on v7x)."""
    if L <= 1024:
        return L                      # single tile, no padding of enc needed
    budget = 4 * 1024 * 1024          # bytes per enc input buffer (x2 double-buffer)
    t = budget // max(1, B * E2 * itemsize)
    t = (t // 128) * 128              # keep the lane dim a multiple of 128
    return int(max(128, min(1024, t)))


def attention_pallas(stacked_hidden, encoder_stacked_outputs, mask, params):
    """JAX glue around the Pallas kernels.

    stacked_hidden          : [B, H2]
    encoder_stacked_outputs : [L, B, E2]  (PyTorch axis convention, NOT permuted)
    mask                    : [B, L]
    params                  : output of prepare_attention_params()
    returns attn_dist       : [B, L]
    """
    whT, weT, bT, vT = params
    L, B, E2 = encoder_stacked_outputs.shape
    D, H2 = whT.shape

    compute_dtype = whT.dtype
    # In a real model enc / hidden would already be in compute_dtype upstream;
    # the casts here are no-ops for the f32 path.
    hidden = stacked_hidden.astype(compute_dtype)
    enc = encoder_stacked_outputs.astype(compute_dtype)

    tL = _choose_tile_l(L, B, E2, jnp.dtype(compute_dtype).itemsize)
    nL = pl.cdiv(L, tL)
    L_pad = nL * tL

    # Mask is tiny: pad to the tiled length; padded columns (and any garbage in
    # a partial trailing enc block) are killed by the -1e10 fill before softmax.
    mask_f = jnp.pad(mask.astype(jnp.float32), ((0, 0), (0, L_pad - L)))

    scores = pl.pallas_call(
        _scores_kernel,
        out_shape=jax.ShapeDtypeStruct((B, L_pad), jnp.float32),
        grid=(nL,),
        in_specs=[
            pl.BlockSpec((B, H2), lambda i: (0, 0)),           # hidden (small, reused)
            pl.BlockSpec((tL, B, E2), lambda i: (i, 0, 0)),    # enc tile (streamed)
            pl.BlockSpec((B, tL), lambda i: (0, i)),           # mask tile
            pl.BlockSpec((D, H2), lambda i: (0, 0)),           # whT
            pl.BlockSpec((D, E2), lambda i: (0, 0)),           # weT
            pl.BlockSpec((D, 1), lambda i: (0, 0)),            # bias column
            pl.BlockSpec((D, 1), lambda i: (0, 0)),            # v column
        ],
        out_specs=pl.BlockSpec((B, tL), lambda i: (0, i)),
        compiler_params=pltpu.CompilerParams(
            dimension_semantics=("parallel",),                 # megacore on v7x
            vmem_limit_bytes=48 * 1024 * 1024),
    )(hidden, enc, mask_f, whT, weT, bT, vT)

    attn = pl.pallas_call(
        _softmax_kernel,
        out_shape=jax.ShapeDtypeStruct((B, L_pad), jnp.float32),
        in_specs=[pl.BlockSpec(memory_space=pltpu.MemorySpace.VMEM)],
        out_specs=pl.BlockSpec(memory_space=pltpu.MemorySpace.VMEM),
    )(scores)

    return attn[:, :L]


def attention_reference(stacked_hidden, encoder_stacked_outputs, mask,
                        w_attn, b_attn, w_v):
    """Pure-JAX reference mirroring the PyTorch forward exactly."""
    L = encoder_stacked_outputs.shape[0]
    h_rep = jnp.repeat(stacked_hidden[:, None, :], L, axis=1)       # [B, L, H2]
    enc = jnp.transpose(encoder_stacked_outputs, (1, 0, 2))         # [B, L, E2]
    cat = jnp.concatenate([h_rep, enc], axis=2)                     # [B, L, H2+E2]
    energy = jnp.tanh(cat @ w_attn.T + b_attn)                      # [B, L, D]
    att = (energy @ w_v.T)[:, :, 0]                                 # [B, L]
    att = jnp.where(mask == 0, -10000000000.0, att)
    return jax.nn.softmax(att, axis=1)


if __name__ == "__main__":
    # Small, module-consistent shapes.
    enc_hid_dim = 16
    dec_hid_dim = 16
    B = 2
    L = 8                      # src len + summary len
    H2 = dec_hid_dim * 2
    E2 = enc_hid_dim * 2
    in_dim = E2 + H2

    key = jax.random.PRNGKey(0)
    k1, k2, k3, k4, k5, k6 = jax.random.split(key, 6)

    # Deterministic parameter init (uniform, like nn.Linear default scale).
    bound_attn = 1.0 / np.sqrt(in_dim)
    w_attn = jax.random.uniform(k1, (dec_hid_dim, in_dim), jnp.float32,
                                -bound_attn, bound_attn)
    b_attn = jax.random.uniform(k2, (dec_hid_dim,), jnp.float32,
                                -bound_attn, bound_attn)
    bound_v = 1.0 / np.sqrt(dec_hid_dim)
    w_v = jax.random.uniform(k3, (1, dec_hid_dim), jnp.float32,
                             -bound_v, bound_v)

    # Inputs.
    stacked_hidden = jax.random.normal(k4, (B, H2), jnp.float32)
    encoder_stacked_outputs = jax.random.normal(k5, (L, B, E2), jnp.float32)
    mask = (jax.random.uniform(k6, (B, L)) > 0.25).astype(jnp.float32)
    mask = mask.at[:, 0].set(1.0)  # at least one valid position per row

    ref = attention_reference(stacked_hidden, encoder_stacked_outputs, mask,
                              w_attn, b_attn, w_v)
    ref = jax.block_until_ready(ref)

    # f32 path (strict correctness check; safe on v5e/v6e/v7x).
    params_f32 = prepare_attention_params(w_attn, b_attn, w_v, jnp.float32)
    out = attention_pallas(stacked_hidden, encoder_stacked_outputs, mask,
                           params_f32)
    out = jax.block_until_ready(out)
    np.testing.assert_allclose(np.asarray(out), np.asarray(ref),
                               rtol=1e-5, atol=1e-5)

    # bf16 MXU-input path (HBM-traffic optimization for v6e/v7x; f32 accumulate,
    # f32 tanh/softmax). Checked against the f32 reference at bf16 tolerance.
    params_bf16 = prepare_attention_params(w_attn, b_attn, w_v, jnp.bfloat16)
    out_bf16 = attention_pallas(stacked_hidden, encoder_stacked_outputs, mask,
                                params_bf16)
    out_bf16 = jax.block_until_ready(out_bf16)
    np.testing.assert_allclose(np.asarray(out_bf16), np.asarray(ref),
                               rtol=0.0, atol=2e-2)

    print("KERNEL_OK")
</pallas_src>

<mosaic_0001>
module attributes {stable_mosaic.version = 11 : i64} {
  func.func @_scores_kernel(%arg0: i32, %arg1: memref<2x32xf32, #tpu.memory_space<vmem>>, %arg2: memref<8x2x32xf32, #tpu.memory_space<vmem>>, %arg3: memref<2x8xf32, #tpu.memory_space<vmem>>, %arg4: memref<16x32xf32, #tpu.memory_space<vmem>>, %arg5: memref<16x32xf32, #tpu.memory_space<vmem>>, %arg6: memref<16x1xf32, #tpu.memory_space<vmem>>, %arg7: memref<16x1xf32, #tpu.memory_space<vmem>>, %arg8: memref<2x8xf32, #tpu.memory_space<vmem>>) attributes {dimension_semantics = [#tpu.dimension_semantics<parallel>], iteration_bounds = array<i64: 1>, scalar_prefetch = 0 : i64, scratch_operands = 0 : i64, tpu.core_type = #tpu.core_type<tc>, window_params = [{pipeline_mode = #tpu.pipeline_mode<synchronous>, transform_indices = @transform_0, window_bounds = array<i64: 2, 32>}, {transform_indices = @transform_1, window_bounds = array<i64: 8, 2, 32>}, {transform_indices = @transform_2, window_bounds = array<i64: 2, 8>}, {pipeline_mode = #tpu.pipeline_mode<synchronous>, transform_indices = @transform_3, window_bounds = array<i64: 16, 32>}, {pipeline_mode = #tpu.pipeline_mode<synchronous>, transform_indices = @transform_4, window_bounds = array<i64: 16, 32>}, {pipeline_mode = #tpu.pipeline_mode<synchronous>, transform_indices = @transform_5, window_bounds = array<i64: 16, 1>}, {pipeline_mode = #tpu.pipeline_mode<synchronous>, transform_indices = @transform_6, window_bounds = array<i64: 16, 1>}, {transform_indices = @transform_7, window_bounds = array<i64: 2, 8>}]} {
    %c0 = arith.constant 0 : index
    %c0_0 = arith.constant 0 : index
    %0 = vector.load %arg4[%c0, %c0_0] : memref<16x32xf32, #tpu.memory_space<vmem>>, vector<16x32xf32>
    %c0_1 = arith.constant 0 : index
    %c0_2 = arith.constant 0 : index
    %1 = vector.load %arg5[%c0_1, %c0_2] : memref<16x32xf32, #tpu.memory_space<vmem>>, vector<16x32xf32>
    %c0_3 = arith.constant 0 : index
    %c0_4 = arith.constant 0 : index
    %2 = vector.load %arg1[%c0_3, %c0_4] : memref<2x32xf32, #tpu.memory_space<vmem>>, vector<2x32xf32>
    %cst = arith.constant dense<0.000000e+00> : vector<16x2xf32>
    %3 = tpu.matmul %0, %2, %cst {dimension_numbers = #tpu.dot_dimension_numbers<[1], [1], [0], [0], [0, 0, 1, 0], [], []>} : vector<16x32xf32>, vector<2x32xf32>, vector<16x2xf32> -> vector<16x2xf32>
    %c0_5 = arith.constant 0 : index
    %c0_6 = arith.constant 0 : index
    %4 = vector.load %arg6[%c0_5, %c0_6] : memref<16x1xf32, #tpu.memory_space<vmem>>, vector<16x1xf32>
    %5 = vector.broadcast %4 : vector<16x1xf32> to vector<16x2xf32>
    %6 = arith.addf %3, %5 : vector<16x2xf32>
    %c0_7 = arith.constant 0 : index
    %c0_8 = arith.constant 0 : index
    %7 = vector.load %arg7[%c0_7, %c0_8] : memref<16x1xf32, #tpu.memory_space<vmem>>, vector<16x1xf32>
    %c0_9 = arith.constant 0 : index
    %c0_10 = arith.constant 0 : index
    %8 = vector.load %arg3[%c0_9, %c0_10] : memref<2x8xf32, #tpu.memory_space<vmem>>, vector<2x8xf32>
    %c0_11 = arith.constant 0 : index
    %c0_12 = arith.constant 0 : index
    %c0_13 = arith.constant 0 : index
    %9 = vector.load %arg2[%c0_11, %c0_12, %c0_13] : memref<8x2x32xf32, #tpu.memory_space<vmem>>, vector<8x1x32xf32>
    %10 = vector.shape_cast %9 : vector<8x1x32xf32> to vector<8x32xf32>
    %cst_14 = arith.constant dense<0.000000e+00> : vector<16x8xf32>
    %11 = tpu.matmul %1, %10, %cst_14 {dimension_numbers = #tpu.dot_dimension_numbers<[1], [1], [0], [0], [0, 0, 1, 0], [], []>} : vector<16x32xf32>, vector<8x32xf32>, vector<16x8xf32> -> vector<16x8xf32>
    %12 = vector.extract_strided_slice %6 {offsets = [0, 0], sizes = [16, 1], strides = [1, 1]} : vector<16x2xf32> to vector<16x1xf32>
    %13 = vector.broadcast %12 : vector<16x1xf32> to vector<16x8xf32>
    %14 = arith.addf %11, %13 : vector<16x8xf32>
    %15 = math.tanh %14 : vector<16x8xf32>
    %16 = vector.broadcast %7 : vector<16x1xf32> to vector<16x8xf32>
    %17 = arith.mulf %15, %16 : vector<16x8xf32>
    %cst_15 = arith.constant dense<0.000000e+00> : vector<8xf32>
    %18 = vector.multi_reduction <add>, %17, %cst_15 [0] : vector<16x8xf32> to vector<8xf32>
    %19 = vector.shape_cast %18 : vector<8xf32> to vector<1x8xf32>
    %c0_16 = arith.constant 0 : index
    %c1 = arith.constant 1 : index
    %c0_17 = arith.constant 0 : index
    %20 = vector.load %arg2[%c0_16, %c1, %c0_17] : memref<8x2x32xf32, #tpu.memory_space<vmem>>, vector<8x1x32xf32>
    %21 = vector.shape_cast %20 : vector<8x1x32xf32> to vector<8x32xf32>
    %cst_18 = arith.constant dense<0.000000e+00> : vector<16x8xf32>
    %22 = tpu.matmul %1, %21, %cst_18 {dimension_numbers = #tpu.dot_dimension_numbers<[1], [1], [0], [0], [0, 0, 1, 0], [], []>} : vector<16x32xf32>, vector<8x32xf32>, vector<16x8xf32> -> vector<16x8xf32>
    %23 = vector.extract_strided_slice %6 {offsets = [0, 1], sizes = [16, 1], strides = [1, 1]} : vector<16x2xf32> to vector<16x1xf32>
    %24 = vector.broadcast %23 : vector<16x1xf32> to vector<16x8xf32>
    %25 = arith.addf %22, %24 : vector<16x8xf32>
    %26 = math.tanh %25 : vector<16x8xf32>
    %27 = vector.broadcast %7 : vector<16x1xf32> to vector<16x8xf32>
    %28 = arith.mulf %26, %27 : vector<16x8xf32>
    %cst_19 = arith.constant dense<0.000000e+00> : vector<8xf32>
    %29 = vector.multi_reduction <add>, %28, %cst_19 [0] : vector<16x8xf32> to vector<8xf32>
    %30 = vector.shape_cast %29 : vector<8xf32> to vector<1x8xf32>
    %31 = tpu.concatenate %19, %30 in 0 : vector<1x8xf32>, vector<1x8xf32> -> vector<2x8xf32>
    %cst_20 = arith.constant 0.000000e+00 : f32
    %32 = vector.broadcast %cst_20 : f32 to vector<2x8xf32>
    %33 = arith.cmpf oeq, %8, %32 : vector<2x8xf32>
    %cst_21 = arith.constant -1.000000e+10 : f32
    %34 = vector.broadcast %cst_21 : f32 to vector<2x8xf32>
    %35 = arith.select %33, %34, %31 : vector<2x8xi1>, vector<2x8xf32>
    %c0_22 = arith.constant 0 : index
    %c0_23 = arith.constant 0 : index
    %36 = vector.load %arg8[%c0_22, %c0_23] : memref<2x8xf32, #tpu.memory_space<vmem>>, vector<2x8xf32>
    tpu.vector_store %arg8[%c0_22, %c0_23], %35 {strides = array<i32>} : memref<2x8xf32, #tpu.memory_space<vmem>>, vector<2x8xf32>,
    return
  }
  func.func @transform_0(%arg0: i32) -> (i32, i32) {
    %c0_i32 = arith.constant 0 : i32
    %c0_i32_0 = arith.constant 0 : i32
    %c0_i32_1 = arith.constant 0 : i32
    return %c0_i32, %c0_i32_0 : i32, i32
  }
  func.func @transform_1(%arg0: i32) -> (i32, i32, i32) {
    %c0_i32 = arith.constant 0 : i32
    %c0_i32_0 = arith.constant 0 : i32
    %c0_i32_1 = arith.constant 0 : i32
    return %arg0, %c0_i32, %c0_i32_0 : i32, i32, i32
  }
  func.func @transform_2(%arg0: i32) -> (i32, i32) {
    %c0_i32 = arith.constant 0 : i32
    %c0_i32_0 = arith.constant 0 : i32
    return %c0_i32, %arg0 : i32, i32
  }
  func.func @transform_3(%arg0: i32) -> (i32, i32) {
    %c0_i32 = arith.constant 0 : i32
    %c0_i32_0 = arith.constant 0 : i32
    %c0_i32_1 = arith.constant 0 : i32
    return %c0_i32, %c0_i32_0 : i32, i32
  }
  func.func @transform_4(%arg0: i32) -> (i32, i32) {
    %c0_i32 = arith.constant 0 : i32
    %c0_i32_0 = arith.constant 0 : i32
    %c0_i32_1 = arith.constant 0 : i32
    return %c0_i32, %c0_i32_0 : i32, i32
  }
  func.func @transform_5(%arg0: i32) -> (i32, i32) {
    %c0_i32 = arith.constant 0 : i32
    %c0_i32_0 = arith.constant 0 : i32
    %c0_i32_1 = arith.constant 0 : i32
    return %c0_i32, %c0_i32_0 : i32, i32
  }
  func.func @transform_6(%arg0: i32) -> (i32, i32) {
    %c0_i32 = arith.constant 0 : i32
    %c0_i32_0 = arith.constant 0 : i32
    %c0_i32_1 = arith.constant 0 : i32
    return %c0_i32, %c0_i32_0 : i32, i32
  }
  func.func @transform_7(%arg0: i32) -> (i32, i32) {
    %c0_i32 = arith.constant 0 : i32
    %c0_i32_0 = arith.constant 0 : i32
    return %c0_i32, %arg0 : i32, i32
  }
}

</mosaic_0001>

<llo_original>
// kernel: tpu_custom_call.1
$region0: #{tpu_custom_call.1}
  #allocation0 [shape = 'u32[]', space=smem, size = 0x4, offset = 0x4, fixed_abs, tag = 'smem constant byte address 0x4 - core index']
  #allocation1 [shape = 'u32[144,128]{1,0:T(1,128)}', space=vmem, size = 0x12000, scoped, tag = 'internal scratch']
  %s0 = inlined_call_operand.hbm [shape: f32[2,32], index: 0, kind: input, shape index: {}]
  %s1 = inlined_call_operand.vmem [shape: f32[8,2,32], index: 1, kind: input, shape index: {}]
  %s2 = inlined_call_operand.hbm [shape: f32[2,8], index: 2, kind: input, shape index: {}]
  %s3 = inlined_call_operand.vmem [shape: f32[16,32], index: 3, kind: input, shape index: {}]
  %s4 = inlined_call_operand.vmem [shape: f32[16,32], index: 4, kind: input, shape index: {}]
  %s5 = inlined_call_operand.vmem [shape: f32[16,1], index: 5, kind: input, shape index: {}]
  %s6 = inlined_call_operand.vmem [shape: f32[16,1], index: 6, kind: input, shape index: {}]
  %s7 = inlined_call_operand.hbm [shape: f32[2,8], index: 7, kind: output, shape index: {}]
  %s8 = sld [smem:[#allocation0]]
  $region46: #{tpu_custom_call.1} parent=0
    _
  %s10 = ssub.s32 1, %s8
  %s11 = scalar_select 0, %s10, %s8
  $region1: #{tpu_custom_call.1} parent=0
    #allocation2 [shape = 'u8[1024]{0}', space=vmem, size = 0x400, scoped, tag = 'input window, operand 0, single buffered']
    #allocation3 [shape = 's32[1]{0}', space=sflag, size = 0x4, scoped, tag = 'scoped memory for tpu_custom_call.1']
    #allocation4 [shape = 's32[1]{0}', space=sflag, size = 0x4, scoped, tag = 'scoped memory for tpu_custom_call.1']
    #allocation5 [shape = 'u8[1024]{0}', space=vmem, size = 0x400, scoped, tag = 'input window, operand 2, single buffered']
    #allocation6 [shape = 's32[1]{0}', space=sflag, size = 0x4, scoped, tag = 'scoped memory for tpu_custom_call.1']
    #allocation7 [shape = 'u8[1024]{0}', space=vmem, size = 0x400, scoped, tag = 'output window, operand 0, single buffered']
    %12 = vsyncpa [#allocation3], 0
    %13 = vsyncpa [#allocation6], 0
    %14 = vsyncpa [#allocation4], 0
    // Predicated region
    $region2: #{tpu_custom_call.1} parent=1 // pred_check
      _
    $region3: #{tpu_custom_call.1} parent=1 // pred_check_branch
      %16 = sbr.rel (0) target = $region5
    $region4: #{tpu_custom_call.1} parent=1 // pred_region
      %s18 = ssub.s32 32, 32
      %19 = vsyncadd [#allocation3], %s18
      %s21 = sshll.u32 [#allocation2], 4
      %s22 = int_to_ptr.vmem [resolvable:$true] %s21
      %24 = dma.hbm_to_vmem [thread:$0]  %s0, 32, %s22, [#allocation3]
    $region5: #{tpu_custom_call.1} parent=1 // pred_fallthru
      _
    // Predicated region
    $region6: #{tpu_custom_call.1} parent=1 // pred_check
      _
    $region7: #{tpu_custom_call.1} parent=1 // pred_check_branch
      %26 = sbr.rel (0) target = $region9
    $region8: #{tpu_custom_call.1} parent=1 // pred_region
      _
    $region9: #{tpu_custom_call.1} parent=1 // pred_fallthru
      _
    // Predicated region
    $region10: #{tpu_custom_call.1} parent=1 // pred_check
      _
    $region11: #{tpu_custom_call.1} parent=1 // pred_check_branch
      %28 = sbr.rel (0) target = $region13
    $region12: #{tpu_custom_call.1} parent=1 // pred_region
      %s30 = ssub.s32 32, 32
      %31 = vsyncadd [#allocation6], %s30
      %s33 = sshll.u32 [#allocation5], 4
      %s34 = int_to_ptr.vmem [resolvable:$true] %s33
      %36 = dma.hbm_to_vmem [thread:$0]  %s2, 32, %s34, [#allocation6]
    $region13: #{tpu_custom_call.1} parent=1 // pred_fallthru
      _
    // Predicated region
    $region14: #{tpu_custom_call.1} parent=1 // pred_check
      _
    $region15: #{tpu_custom_call.1} parent=1 // pred_check_branch
      %38 = sbr.rel (0) target = $region17
    $region16: #{tpu_custom_call.1} parent=1 // pred_region
      _
    $region17: #{tpu_custom_call.1} parent=1 // pred_fallthru
      _
    // Predicated region
    $region18: #{tpu_custom_call.1} parent=1 // pred_check
      _
    $region19: #{tpu_custom_call.1} parent=1 // pred_check_branch
      %40 = sbr.rel (0) target = $region21
    $region20: #{tpu_custom_call.1} parent=1 // pred_region
      _
    $region21: #{tpu_custom_call.1} parent=1 // pred_fallthru
      _
    // Predicated region
    $region22: #{tpu_custom_call.1} parent=1 // pred_check
      _
    $region23: #{tpu_custom_call.1} parent=1 // pred_check_branch
      %42 = sbr.rel (0) target = $region25
    $region24: #{tpu_custom_call.1} parent=1 // pred_region
      _
    $region25: #{tpu_custom_call.1} parent=1 // pred_fallthru
      _
    // Predicated region
    $region26: #{tpu_custom_call.1} parent=1 // pred_check
      _
    $region27: #{tpu_custom_call.1} parent=1 // pred_check_branch
      %44 = sbr.rel (0) target = $region29
    $region28: #{tpu_custom_call.1} parent=1 // pred_region
      _
    $region29: #{tpu_custom_call.1} parent=1 // pred_fallthru
      _
    // Predicated region
    $region30: #{tpu_custom_call.1} parent=1 // pred_check
      _
    $region31: #{tpu_custom_call.1} parent=1 // pred_check_branch
      %46 = sbr.rel (0) target = $region33
    $region32: #{tpu_custom_call.1} parent=1 // pred_region
      %47 = dma.done [#allocation3], 32
    $region33: #{tpu_custom_call.1} parent=1 // pred_fallthru
      _
    // Predicated region
    $region34: #{tpu_custom_call.1} parent=1 // pred_check
      _
    $region35: #{tpu_custom_call.1} parent=1 // pred_check_branch
      %49 = sbr.rel (0) target = $region37
    $region36: #{tpu_custom_call.1} parent=1 // pred_region
      %50 = dma.done [#allocation6], 32
    $region37: #{tpu_custom_call.1} parent=1 // pred_fallthru
      _
    %v51 = vld [vmem:[%s3] sm:$0xff]
    %v52 = vld [vmem:[%s3 + $0x8] sm:$0xff]
    %v53 = vld [vmem:[%s4] sm:$0xff]
    %v54 = vld [vmem:[%s4 + $0x8] sm:$0xff]
    %v55 = vld [vmem:[#allocation2] sm:$0x3]
    %v56 = vld [vmem:[%s5] sm:$0xff]
    %v57 = vld [vmem:[%s5 + $0x8] sm:$0xff]
    %59 = vset.pattern.permute.xlu0 0
    %60 = vperm.xlu0 %59, %v56
    %v61 = vpop.permute.xlu0 %60
    %64 = vset.pattern.permute.xlu0 0
    %65 = vperm.xlu0 %64, %v57
    %v66 = vpop.permute.xlu0 %65
    %vm68 = vcmask 261120
    %v70 = vsel %vm68, %v51, 0
    %v73 = vsel %vm68, %v52, 0
    %v76 = vsel %vm68, %v55, 0
    %78 = vmatprep.subr.mxu0 0.0
    %79 = vmatpush1.xpose.msra.mxu0 %v76
    %80 = vmatprep.subr.mxu0 0.0
    %81 = vmatpush1.xpose.msra.mxu0 0.0
    %82 = vmatprep.subr.mxu0 0.0
    %83 = vmatpush1.xpose.msra.mxu0 0.0
    %84 = vmatprep.subr.mxu0 0.0
    %85 = vmatpush1.xpose.msra.mxu0 0.0
    %86 = vmatprep.subr.mxu0 0.0
    %87 = vmatpush1.xpose.msra.mxu0 0.0
    %88 = vmatprep.subr.mxu0 0.0
    %89 = vmatpush1.xpose.msra.mxu0 0.0
    %90 = vmatprep.subr.mxu0 0.0
    %91 = vmatpush1.xpose.msra.mxu0 0.0
    %92 = vmatprep.subr.mxu0 0.0
    %93 = vmatpush1.xpose.msra.mxu0 0.0
    %94 = vmatprep.subr.mxu0 0.0
    %95 = vmatpush1.xpose.msra.mxu0 0.0
    %96 = vmatprep.subr.mxu0 0.0
    %97 = vmatpush1.xpose.msra.mxu0 0.0
    %98 = vmatprep.subr.mxu0 0.0
    %99 = vmatpush1.xpose.msra.mxu0 0.0
    %100 = vmatprep.subr.mxu0 0.0
    %101 = vmatpush1.xpose.msra.mxu0 0.0
    %102 = vmatprep.subr.mxu0 0.0
    %103 = vmatpush1.xpose.msra.mxu0 0.0
    %104 = vmatprep.subr.mxu0 0.0
    %105 = vmatpush1.xpose.msra.mxu0 0.0
    %106 = vmatprep.subr.mxu0 0.0
    %107 = vmatpush1.xpose.msra.mxu0 0.0
    %108 = vmatprep.subr.mxu0 0.0
    %109 = vmatpush1.xpose.msra.mxu0 0.0
    %110 = vmatprep.subr.mxu0 0.0
    %111 = vmatpush1.xpose.msra.mxu0 0.0
    %112 = vmatprep.subr.mxu0 0.0
    %113 = vmatpush1.xpose.msra.mxu0 0.0
    %114 = vmatprep.subr.mxu0 0.0
    %115 = vmatpush1.xpose.msra.mxu0 0.0
    %116 = vmatprep.subr.mxu0 0.0
    %117 = vmatpush1.xpose.msra.mxu0 0.0
    %118 = vmatprep.subr.mxu0 0.0
    %119 = vmatpush1.xpose.msra.mxu0 0.0
    %120 = vmatprep.subr.mxu0 0.0
    %121 = vmatpush1.xpose.msra.mxu0 0.0
    %122 = vmatprep.subr.mxu0 0.0
    %123 = vmatpush1.xpose.msra.mxu0 0.0
    %124 = vmatprep.subr.mxu0 0.0
    %125 = vmatpush1.xpose.msra.mxu0 0.0
    %126 = vmatprep.subr.mxu0 0.0
    %127 = vmatpush1.xpose.msra.mxu0 0.0
    %128 = vmatprep.subr.mxu0 0.0
    %129 = vmatpush1.xpose.msra.mxu0 0.0
    %130 = vmatprep.subr.mxu0 0.0
    %131 = vmatpush1.xpose.msra.mxu0 0.0
    %132 = vmatprep.subr.mxu0 0.0
    %133 = vmatpush1.xpose.msra.mxu0 0.0
    %134 = vmatprep.subr.mxu0 0.0
    %135 = vmatpush1.xpose.msra.mxu0 0.0
    %136 = vmatprep.subr.mxu0 0.0
    %137 = vmatpush1.xpose.msra.mxu0 0.0
    %138 = vmatprep.subr.mxu0 0.0
    %139 = vmatpush1.xpose.msra.mxu0 0.0
    %140 = vmatprep.subr.mxu0 0.0
    %141 = vmatpush1.xpose.msra.mxu0 0.0
    %142 = vmatprep.mubr.f32.mxu0 0.0
    %143 = vmatmul.mubr.f32.gmra.mrb[0].mxu0 %v70
    %v144 = vpop.f32.mrb[0].mxu0
    %v145 = vadd.f32 %v61, %v144
    %v146 = vpop.f32.mrb[0].mxu0
    %147 = vmatprep.mubr.f32.mxu0 0.0
    %148 = vmatmul.mubr.f32.gmra.mrb[0].mxu0 %v73
    %v149 = vpop.f32.mrb[0].mxu0
    %v150 = vadd.f32 %v66, %v149
    %v151 = vpop.f32.mrb[0].mxu0
    %152 = vdwg.mxu0
    %v153 = vld [vmem:[%s6] sm:$0xff]
    %v154 = vld [vmem:[%s6 + $0x8] sm:$0xff]
    %v155 = vld [vmem:[#allocation5] sm:$0x3]
    %v156 = vld [vmem:[%s1] sm:$0x1]
    %v157 = vld [vmem:[%s1 + $0x2] sm:$0x1]
    %v158 = vld [vmem:[%s1 + $0x4] sm:$0x1]
    %v159 = vld [vmem:[%s1 + $0x6] sm:$0x1]
    %v160 = vld [vmem:[%s1 + $0x8] sm:$0x1]
    %v161 = vld [vmem:[%s1 + $0xa] sm:$0x1]
    %v162 = vld [vmem:[%s1 + $0xc] sm:$0x1]
    %v163 = vld [vmem:[%s1 + $0xe] sm:$0x1]
    %165 = vset.pattern.permute.xlu0 0
    %166 = vperm.xlu0 %165, %v145
    %v167 = vpop.permute.xlu0 %166
    %170 = vset.pattern.permute.xlu0 0
    %171 = vperm.xlu0 %170, %v150
    %v172 = vpop.permute.xlu0 %171
    %v182 = vrot.slane %v157, 7
    %vm183 = vcmask 1041409
    %v184 = vsel %vm183, %v182, %v156
    %v185 = vrot.slane %v158, 6
    %vm186 = vcmask 1042434
    %v187 = vsel %vm186, %v185, %v184
    %v188 = vrot.slane %v159, 5
    %vm189 = vcmask 1043459
    %v190 = vsel %vm189, %v188, %v187
    %v191 = vrot.slane %v160, 4
    %vm192 = vcmask 1044484
    %v193 = vsel %vm192, %v191, %v190
    %v194 = vrot.slane %v161, 3
    %vm195 = vcmask 1045509
    %v196 = vsel %vm195, %v194, %v193
    %v197 = vrot.slane %v162, 2
    %vm198 = vcmask 1046534
    %v199 = vsel %vm198, %v197, %v196
    %v200 = vrot.slane %v163, 1
    %vm201 = vcmask 1047559
    %v202 = vsel %vm201, %v200, %v199
    %v204 = vsel %vm68, %v53, 0
    %v207 = vsel %vm68, %v54, 0
    %v209 = vsel %vm68, %v202, 0
    %211 = vmatprep.subr.mxu0 0.0
    %212 = vmatpush1.xpose.msra.mxu0 %v209
    %213 = vmatprep.subr.mxu0 0.0
    %214 = vmatpush1.xpose.msra.mxu0 0.0
    %215 = vmatprep.subr.mxu0 0.0
    %216 = vmatpush1.xpose.msra.mxu0 0.0
    %217 = vmatprep.subr.mxu0 0.0
    %218 = vmatpush1.xpose.msra.mxu0 0.0
    %219 = vmatprep.subr.mxu0 0.0
    %220 = vmatpush1.xpose.msra.mxu0 0.0
    %221 = vmatprep.subr.mxu0 0.0
    %222 = vmatpush1.xpose.msra.mxu0 0.0
    %223 = vmatprep.subr.mxu0 0.0
    %224 = vmatpush1.xpose.msra.mxu0 0.0
    %225 = vmatprep.subr.mxu0 0.0
    %226 = vmatpush1.xpose.msra.mxu0 0.0
    %227 = vmatprep.subr.mxu0 0.0
    %228 = vmatpush1.xpose.msra.mxu0 0.0
    %229 = vmatprep.subr.mxu0 0.0
    %230 = vmatpush1.xpose.msra.mxu0 0.0
    %231 = vmatprep.subr.mxu0 0.0
    %232 = vmatpush1.xpose.msra.mxu0 0.0
    %233 = vmatprep.subr.mxu0 0.0
    %234 = vmatpush1.xpose.msra.mxu0 0.0
    %235 = vmatprep.subr.mxu0 0.0
    %236 = vmatpush1.xpose.msra.mxu0 0.0
    %237 = vmatprep.subr.mxu0 0.0
    %238 = vmatpush1.xpose.msra.mxu0 0.0
    %239 = vmatprep.subr.mxu0 0.0
    %240 = vmatpush1.xpose.msra.mxu0 0.0
    %241 = vmatprep.subr.mxu0 0.0
    %242 = vmatpush1.xpose.msra.mxu0 0.0
    %243 = vmatprep.subr.mxu0 0.0
    %244 = vmatpush1.xpose.msra.mxu0 0.0
    %245 = vmatprep.subr.mxu0 0.0
    %246 = vmatpush1.xpose.msra.mxu0 0.0
    %247 = vmatprep.subr.mxu0 0.0
    %248 = vmatpush1.xpose.msra.mxu0 0.0
    %249 = vmatprep.subr.mxu0 0.0
    %250 = vmatpush1.xpose.msra.mxu0 0.0
    %251 = vmatprep.subr.mxu0 0.0
    %252 = vmatpush1.xpose.msra.mxu0 0.0
    %253 = vmatprep.subr.mxu0 0.0
    %254 = vmatpush1.xpose.msra.mxu0 0.0
    %255 = vmatprep.subr.mxu0 0.0
    %256 = vmatpush1.xpose.msra.mxu0 0.0
    %257 = vmatprep.subr.mxu0 0.0
    %258 = vmatpush1.xpose.msra.mxu0 0.0
    %259 = vmatprep.subr.mxu0 0.0
    %260 = vmatpush1.xpose.msra.mxu0 0.0
    %261 = vmatprep.subr.mxu0 0.0
    %262 = vmatpush1.xpose.msra.mxu0 0.0
    %263 = vmatprep.subr.mxu0 0.0
    %264 = vmatpush1.xpose.msra.mxu0 0.0
    %265 = vmatprep.subr.mxu0 0.0
    %266 = vmatpush1.xpose.msra.mxu0 0.0
    %267 = vmatprep.subr.mxu0 0.0
    %268 = vmatpush1.xpose.msra.mxu0 0.0
    %269 = vmatprep.subr.mxu0 0.0
    %270 = vmatpush1.xpose.msra.mxu0 0.0
    %271 = vmatprep.subr.mxu0 0.0
    %272 = vmatpush1.xpose.msra.mxu0 0.0
    %273 = vmatprep.subr.mxu0 0.0
    %274 = vmatpush1.xpose.msra.mxu0 0.0
    %275 = vmatprep.mubr.f32.mxu0 0.0
    %276 = vmatmul.mubr.f32.gmra.mrb[0].mxu0 %v204
    %v277 = vpop.f32.mrb[0].mxu0
    %v278 = vadd.f32 %v167, %v277
    %v279 = vpop.f32.mrb[0].mxu0
    %280 = vmatprep.mubr.f32.mxu0 0.0
    %281 = vmatmul.mubr.f32.gmra.mrb[0].mxu0 %v207
    %v282 = vpop.f32.mrb[0].mxu0
    %v283 = vadd.f32 %v172, %v282
    %v284 = vpop.f32.mrb[0].mxu0
    %285 = vdwg.mxu0
    %v286 = vtanh.pop %v278
    %v287 = vtanh.pop %v283
    %289 = vset.pattern.permute.xlu0 0
    %290 = vperm.xlu0 %289, %v153
    %v291 = vpop.permute.xlu0 %290
    %294 = vset.pattern.permute.xlu0 0
    %295 = vperm.xlu0 %294, %v154
    %v296 = vpop.permute.xlu0 %295
    %v298 = vmul.f32 %v286, %v291
    %v299 = vmul.f32 %v287, %v296
    %vm300 = vcmask 64512
    %v301 = vsel %vm300, %v298, 0.0
    %v302 = vsel %vm300, %v299, 0.0
    %v303 = vadd.f32 %v301, %v302
    %v304 = vrot.slane %v303, 4
    %v305 = vadd.f32 %v303, %v304
    %v306 = vrot.slane %v305, 2
    %v307 = vadd.f32 %v305, %v306
    %v308 = vrot.slane %v307, 1
    %v309 = vadd.f32 %v307, %v308
    %v310 = vld [vmem:[%s1 + $0x1] sm:$0x1]
    %v311 = vld [vmem:[%s1 + $0x3] sm:$0x1]
    %v312 = vld [vmem:[%s1 + $0x5] sm:$0x1]
    %v313 = vld [vmem:[%s1 + $0x7] sm:$0x1]
    %v314 = vld [vmem:[%s1 + $0x9] sm:$0x1]
    %v315 = vld [vmem:[%s1 + $0xb] sm:$0x1]
    %v316 = vld [vmem:[%s1 + $0xd] sm:$0x1]
    %v317 = vld [vmem:[%s1 + $0xf] sm:$0x1]
    %318 = vset.pattern.permute.xlu0 1
    %319 = vperm.xlu0 %318, %v145
    %v320 = vpop.permute.xlu0 %319
    %322 = vset.pattern.permute.xlu0 1
    %323 = vperm.xlu0 %322, %v150
    %v324 = vpop.permute.xlu0 %323
    %v334 = vrot.slane %v311, 7
    %v335 = vsel %vm183, %v334, %v310
    %v336 = vrot.slane %v312, 6
    %v337 = vsel %vm186, %v336, %v335
    %v338 = vrot.slane %v313, 5
    %v339 = vsel %vm189, %v338, %v337
    %v340 = vrot.slane %v314, 4
    %v341 = vsel %vm192, %v340, %v339
    %v342 = vrot.slane %v315, 3
    %v343 = vsel %vm195, %v342, %v341
    %v344 = vrot.slane %v316, 2
    %v345 = vsel %vm198, %v344, %v343
    %v346 = vrot.slane %v317, 1
    %v347 = vsel %vm201, %v346, %v345
    %v348 = vsel %vm68, %v347, 0
    %350 = vmatprep.subr.mxu0 0.0
    %351 = vmatpush1.xpose.msra.mxu0 %v348
    %352 = vmatprep.subr.mxu0 0.0
    %353 = vmatpush1.xpose.msra.mxu0 0.0
    %354 = vmatprep.subr.mxu0 0.0
    %355 = vmatpush1.xpose.msra.mxu0 0.0
    %356 = vmatprep.subr.mxu0 0.0
    %357 = vmatpush1.xpose.msra.mxu0 0.0
    %358 = vmatprep.subr.mxu0 0.0
    %359 = vmatpush1.xpose.msra.mxu0 0.0
    %360 = vmatprep.subr.mxu0 0.0
    %361 = vmatpush1.xpose.msra.mxu0 0.0
    %362 = vmatprep.subr.mxu0 0.0
    %363 = vmatpush1.xpose.msra.mxu0 0.0
    %364 = vmatprep.subr.mxu0 0.0
    %365 = vmatpush1.xpose.msra.mxu0 0.0
    %366 = vmatprep.subr.mxu0 0.0
    %367 = vmatpush1.xpose.msra.mxu0 0.0
    %368 = vmatprep.subr.mxu0 0.0
    %369 = vmatpush1.xpose.msra.mxu0 0.0
    %370 = vmatprep.subr.mxu0 0.0
    %371 = vmatpush1.xpose.msra.mxu0 0.0
    %372 = vmatprep.subr.mxu0 0.0
    %373 = vmatpush1.xpose.msra.mxu0 0.0
    %374 = vmatprep.subr.mxu0 0.0
    %375 = vmatpush1.xpose.msra.mxu0 0.0
    %376 = vmatprep.subr.mxu0 0.0
    %377 = vmatpush1.xpose.msra.mxu0 0.0
    %378 = vmatprep.subr.mxu0 0.0
    %379 = vmatpush1.xpose.msra.mxu0 0.0
    %380 = vmatprep.subr.mxu0 0.0
    %381 = vmatpush1.xpose.msra.mxu0 0.0
    %382 = vmatprep.subr.mxu0 0.0
    %383 = vmatpush1.xpose.msra.mxu0 0.0
    %384 = vmatprep.subr.mxu0 0.0
    %385 = vmatpush1.xpose.msra.mxu0 0.0
    %386 = vmatprep.subr.mxu0 0.0
    %387 = vmatpush1.xpose.msra.mxu0 0.0
    %388 = vmatprep.subr.mxu0 0.0
    %389 = vmatpush1.xpose.msra.mxu0 0.0
    %390 = vmatprep.subr.mxu0 0.0
    %391 = vmatpush1.xpose.msra.mxu0 0.0
    %392 = vmatprep.subr.mxu0 0.0
    %393 = vmatpush1.xpose.msra.mxu0 0.0
    %394 = vmatprep.subr.mxu0 0.0
    %395 = vmatpush1.xpose.msra.mxu0 0.0
    %396 = vmatprep.subr.mxu0 0.0
    %397 = vmatpush1.xpose.msra.mxu0 0.0
    %398 = vmatprep.subr.mxu0 0.0
    %399 = vmatpush1.xpose.msra.mxu0 0.0
    %400 = vmatprep.subr.mxu0 0.0
    %401 = vmatpush1.xpose.msra.mxu0 0.0
    %402 = vmatprep.subr.mxu0 0.0
    %403 = vmatpush1.xpose.msra.mxu0 0.0
    %404 = vmatprep.subr.mxu0 0.0
    %405 = vmatpush1.xpose.msra.mxu0 0.0
    %406 = vmatprep.subr.mxu0 0.0
    %407 = vmatpush1.xpose.msra.mxu0 0.0
    %408 = vmatprep.subr.mxu0 0.0
    %409 = vmatpush1.xpose.msra.mxu0 0.0
    %410 = vmatprep.subr.mxu0 0.0
    %411 = vmatpush1.xpose.msra.mxu0 0.0
    %412 = vmatprep.subr.mxu0 0.0
    %413 = vmatpush1.xpose.msra.mxu0 0.0
    %414 = vmatprep.mubr.f32.mxu0 0.0
    %415 = vmatmul.mubr.f32.gmra.mrb[0].mxu0 %v204
    %v416 = vpop.f32.mrb[0].mxu0
    %v417 = vadd.f32 %v320, %v416
    %v418 = vpop.f32.mrb[0].mxu0
    %419 = vmatprep.mubr.f32.mxu0 0.0
    %420 = vmatmul.mubr.f32.gmra.mrb[0].mxu0 %v207
    %v421 = vpop.f32.mrb[0].mxu0
    %v422 = vadd.f32 %v324, %v421
    %v423 = vpop.f32.mrb[0].mxu0
    %424 = vdwg.mxu0
    %v425 = vtanh.pop %v417
    %v426 = vtanh.pop %v422
    %v427 = vmul.f32 %v425, %v291
    %v428 = vmul.f32 %v426, %v296
    %v429 = vsel %vm300, %v427, 0.0
    %v430 = vsel %vm300, %v428, 0.0
    %v431 = vadd.f32 %v429, %v430
    %v432 = vrot.slane %v431, 4
    %v433 = vadd.f32 %v431, %v432
    %v434 = vrot.slane %v433, 2
    %v435 = vadd.f32 %v433, %v434
    %v436 = vrot.slane %v435, 1
    %v437 = vadd.f32 %v435, %v436
    %vm438 = vcmask 1040384
    %v439 = vsel %vm438, %v309, %v437
    %vm440 = vcmp.eq.f32.partialorder %v155, 0.0
    %v441 = vsel %vm440, -1e+10, %v439
    %vm442 = vcmask 58368
    %443 = vst.msk [vmem:[#allocation7] sm:$0x3] %vm442, %v441
    // Predicated region
    $region38: #{tpu_custom_call.1} parent=1 // pred_check
      _
    $region39: #{tpu_custom_call.1} parent=1 // pred_check_branch
      %445 = sbr.rel (0) target = $region41
    $region40: #{tpu_custom_call.1} parent=1 // pred_region
      %s447 = ssub.s32 32, 32
      %448 = vsyncadd [#allocation4], %s447
      %s450 = sshll.u32 [#allocation7], 4
      %s451 = int_to_ptr.vmem [resolvable:$true] %s450
      %453 = dma.vmem_to_hbm [thread:$0]  %s451, 32, %s7, [#allocation4]
    $region41: #{tpu_custom_call.1} parent=1 // pred_fallthru
      _
    // Predicated region
    $region42: #{tpu_custom_call.1} parent=1 // pred_check
      _
    $region43: #{tpu_custom_call.1} parent=1 // pred_check_branch
      %455 = sbr.rel (0) target = $region45
    $region44: #{tpu_custom_call.1} parent=1 // pred_region
      %456 = dma.done [#allocation4], 32
    $region45: #{tpu_custom_call.1} parent=1 // pred_fallthru
      _
    %457 = vsyncpa [#allocation3], 1
    %458 = vsyncpa [#allocation6], 1
    %459 = vsyncpa [#allocation4], 1

</llo_original>
